<compile_context>
chip_gen: v7x
topology: tpu7x:2x2x1
jax: 0.10.0
libtpu: 0.0.40
codegen_flags: <defaults>
</compile_context>

<pallas_src>
import functools

import jax
import jax.numpy as jnp
import numpy as np
from jax.experimental import pallas as pl
from jax.experimental.pallas import tpu as pltpu

# ------------------------- config consistent with AutoGroupModel ----------------
INPUT_DIM = 100            # feature vocabulary size (input_dim)
N_LOOKUP = 8               # input_dim4lookup
EMBED_DIMS = [8, 8, 8]     # per-order embedding dims
BUCKET_NUMS = [4, 4, 4]    # per-order hash bucket counts
MAX_ORDER = 3
TEMPERATURE = 0.7
LAMBDA_C = 0.5
HIDDEN_DIMS = [32, 16]
DROPOUT_PROB = 0.0         # eval mode -> dropout is identity
BATCH = 16
COMPUTE_DTYPE = jnp.bfloat16   # MXU operand storage dtype (f32 accumulation)

MLP_INPUT_DIM = EMBED_DIMS[0] * BUCKET_NUMS[0] + sum(BUCKET_NUMS[1:])


# ------------------------------- fused Pallas kernel -----------------------------
def _autogroup_fused_kernel(x_ref, g_ref, ms_ref, pc_ref, b1_ref, mx_ref, mh_ref,
                            *rest, num_hidden, h1, kd23):
    """Whole forward (3 group layers + MLP + linear term) per batch tile.

    x_ref  : (Bt, P)       packed bf16 gather: per lookup [e1(8)|e2(8)|e3(8)|lin(1)]
    g_ref  : (P, h1+kd23+1) block-diag [A1@W1a | A2 | A3 | ones(lin)]   (bf16)
    ms_ref : (kd23, h1)     [S2@W1b ; S3@W1c]                           (bf16)
    pc_ref : (P, h1)        -lambda_c * [C2@W1b / C3@W1c] at e2/e3 lanes (bf16)
    b1_ref : (1, h1) f32 ; mx_ref/mh_ref : f32 {0,1} masks marking cube lanes
    rest   : [W2, b2, ..., Wout_row(1,h_last+1), bias_total(SMEM), out_ref]
    """
    out_ref = rest[-1]
    bias_ref = rest[-2]                      # (1,1) SMEM: mlp out bias + linear bias
    wout_ref = rest[-3]                      # (1, h_last+1) = [Wout^T | 1]
    hidden = rest[:-3]                       # (W2, b2, ...)
    f32 = jnp.float32
    cdt = ms_ref.dtype                       # MXU operand dtype (bf16)

    x = x_ref[...]                                             # (Bt, P) bf16
    # one block-diagonal matmul: [g1@W1a | h2 | h3 | linear-sum] in a single pass
    y = jnp.dot(x, g_ref[...], preferred_element_type=f32)     # (Bt, h1+kd23+1)

    # elementwise power chains in f32 (VPU); masks select square vs cube lanes
    xf = x.astype(f32)
    x2 = xf * xf
    xc = jnp.where(mx_ref[...] != 0.0, x2 * xf, x2)            # e2^2 | e3^3 lanes
    h = y[:, h1:h1 + kd23]                                     # [h2 | h3]
    hs = h * h
    hp = jnp.where(mh_ref[...] != 0.0, hs * h, hs)             # h2^2 | h3^3

    # first MLP layer: every contribution accumulates into one (Bt, h1) tile
    z = (y[:, :h1]
         + jnp.dot(hp.astype(cdt), ms_ref[...], preferred_element_type=f32)
         + jnp.dot(xc.astype(cdt), pc_ref[...], preferred_element_type=f32)
         + b1_ref[...])
    z = jnp.maximum(z, 0.0)                                    # dropout (eval) = id

    for j in range(num_hidden - 1):
        w = hidden[2 * j][...]
        b = hidden[2 * j + 1][...]
        z = jnp.maximum(jnp.dot(z.astype(cdt), w, preferred_element_type=f32) + b,
                        0.0)

    # output layer fused with the linear score, emitted lane-dense:
    #   row[0, b] = z[b, :] @ Wout + sum_n linear_w[id[b, n]]
    lin = y[:, h1 + kd23:h1 + kd23 + 1]                        # (Bt, 1)
    cat = jnp.concatenate([z, lin], axis=1).astype(cdt)        # (Bt, h_last+1)
    row = jax.lax.dot_general(wout_ref[...], cat,
                              dimension_numbers=(((1,), (1,)), ((), ())),
                              preferred_element_type=f32)      # (1, Bt)
    out_ref[...] = (row + bias_ref[0, 0]).reshape(1, 1, -1)    # lane-dense store


# ------------------------------- Pallas wrapper ----------------------------------
def _pick_block_b(batch):
    # tiny batches: one grid step (avoid per-step overhead, review item 8);
    # production: 128-row tiles -> lane-dense stores + real DMA/compute overlap.
    if batch <= 128:
        return batch
    for cand in (128, 64, 32, 16, 8):
        if batch % cand == 0:
            return cand
    return batch


def autogroup_forward_pallas(params, feature_id, block_b=None):
    B = feature_id.shape[0]
    if block_b is None:
        block_b = _pick_block_b(B)
    assert B % block_b == 0, "batch must be a multiple of the batch tile"
    num_blocks = B // block_b
    pc = params["precomp"]
    h1 = HIDDEN_DIMS[0]
    kd23 = sum(EMBED_DIMS[i] * BUCKET_NUMS[i] for i in range(1, MAX_ORDER))

    # ONE fused gather (3 embedding tables + linear_w in a single table), already
    # bf16, flattened to the packed (B, N*(sum d + 1)) activation.
    # TODO(synk): for production, drop this HBM round-trip entirely via
    # CompilerParams(allow_input_fusion=...) or an in-kernel one-hot lookup.
    x = pc["table_cat"][feature_id].reshape(B, -1)             # (B, 200) bf16

    weights = [pc["G"], pc["Ms"], pc["Pc"], pc["b1"], pc["mask_x"], pc["mask_h"]]
    weights += pc["hidden"]                                    # [W2, b2, ...]
    weights += [pc["wout_row"]]

    in_specs = [pl.BlockSpec((block_b, x.shape[1]), lambda i: (i, 0))]
    for wgt in weights:                                        # frozen operands: full blocks
        in_specs.append(pl.BlockSpec(wgt.shape, lambda i: (0, 0)))
    in_specs.append(pl.BlockSpec(memory_space=pltpu.MemorySpace.SMEM))  # (1,1) scalar

    kernel = functools.partial(_autogroup_fused_kernel,
                               num_hidden=len(HIDDEN_DIMS), h1=h1, kd23=kd23)

    out = pl.pallas_call(
        kernel,
        out_shape=jax.ShapeDtypeStruct((num_blocks, 1, block_b), jnp.float32),
        grid=(num_blocks,),
        in_specs=in_specs,
        out_specs=pl.BlockSpec((1, 1, block_b), lambda i: (i, 0, 0)),
        # "arbitrary": only shard across v7x TensorCores when per-core work is
        # genuinely compute-bound (review item 8); tiny/DMA-bound tiles stay on one.
        compiler_params=pltpu.CompilerParams(dimension_semantics=("arbitrary",)),
    )(x, *weights, pc["bias_total"])
    return out.reshape(B)


# ------------------------------- model glue (plain JAX) --------------------------
def gumbel_softmax_choice(logits, temperature, key):
    """Straight-through Gumbel-softmax; forward value = hard one-hot, take slot 0."""
    # TODO(synk): FeatureGroupLayer source not provided; assuming deterministic
    # Gumbel noise + straight-through argmax, selecting channel 0 as "in bucket".
    u = jax.random.uniform(key, logits.shape, minval=1e-6, maxval=1.0 - 1e-6)
    g = -jnp.log(-jnp.log(u))
    y = jax.nn.softmax((logits + g) / temperature, axis=-1)
    y_hard = (y >= jnp.max(y, axis=-1, keepdims=True)).astype(y.dtype)
    return y_hard[..., 0]                                       # (N, k)


def precompute_frozen(params, compute_dtype=COMPUTE_DTYPE):
    """Fold the frozen structure (fix_structure=True) + W1 + lambda_c into dense operands."""
    assert MAX_ORDER <= 3, "power-mask below covers orders 2 (square) and 3 (cube)"
    f32 = np.float32
    n, mo = N_LOOKUP, MAX_ORDER
    d_tot = sum(EMBED_DIMS) + 1                      # fused lookup-table width (+1 linear)
    P = n * d_tot

    w = [np.asarray(params["choice"][i] * params["hash_wt"][i], f32) for i in range(mo)]
    mp = params["mlp_params"]
    W1 = np.asarray(mp[0], f32)
    h1 = W1.shape[1]
    kd = [EMBED_DIMS[i] * BUCKET_NUMS[i] for i in range(mo)]

    # row-splits of W1 matching torch.cat([g1, g2, g3], dim=1)
    bounds = np.cumsum([kd[0]] + BUCKET_NUMS[1:]).tolist()
    W1_parts = [W1[:bounds[0]]] + [W1[bounds[i - 1]:bounds[i]] for i in range(1, mo)]

    # ---- grouped-row operands (rows: [e1-flat | e2-flat | e3-flat | linear]) ----
    nd = [n * EMBED_DIMS[i] for i in range(mo)]
    row_off = np.concatenate([[0], np.cumsum(nd)]).astype(int)
    lin_row = int(row_off[mo])
    width_g = h1 + sum(kd[1:]) + 1

    G = np.zeros((P, width_g), f32)
    Pc = np.zeros((P, h1), f32)
    mask_x = np.zeros((1, P), f32)
    Ms_rows, mask_h_rows = [], []

    A1 = np.kron(w[0], np.eye(EMBED_DIMS[0], dtype=f32))         # (n*d1, k1*d1)
    G[row_off[0]:row_off[1], :h1] = A1 @ W1_parts[0]             # order-1 -> layer 1
    col = h1
    for i in range(1, mo):
        order = i + 1
        d, k = EMBED_DIMS[i], BUCKET_NUMS[i]
        Ai = np.kron(w[i], np.eye(d, dtype=f32))                 # (n*d, k*d)
        G[row_off[i]:row_off[i + 1], col:col + k * d] = Ai
        Si = np.kron(np.eye(k, dtype=f32), np.ones((d, 1), f32)) # sum over d per bucket
        Ci = np.repeat(w[i] ** order, d, axis=0)                 # (n*d, k)
        Ms_rows.append(Si @ W1_parts[i])                         # (k*d, h1)
        Pc[row_off[i]:row_off[i + 1]] = -LAMBDA_C * (Ci @ W1_parts[i])
        cube = 1.0 if order >= 3 else 0.0
        mask_x[0, row_off[i]:row_off[i + 1]] = cube
        mask_h_rows.append(np.full((k * d,), cube, f32))
        col += k * d
    G[lin_row:lin_row + n, col] = 1.0                            # linear-score column
    Ms = np.concatenate(Ms_rows, axis=0)
    mask_h = np.concatenate(mask_h_rows)[None, :]

    # ---- permute rows from grouped layout to the fused-gather (interleaved) layout
    gmap = np.zeros((P,), np.int64)
    col_off = np.concatenate([[0], np.cumsum(EMBED_DIMS)]).astype(int)
    for r in range(P):
        nn, c = divmod(r, d_tot)
        if c == d_tot - 1:
            gmap[r] = lin_row + nn
        else:
            i = int(np.searchsorted(col_off, c, side="right") - 1)
            gmap[r] = row_off[i] + nn * EMBED_DIMS[i] + (c - col_off[i])
    G, Pc, mask_x = G[gmap], Pc[gmap], mask_x[:, gmap]

    nh = len(HIDDEN_DIMS)
    pc = {
        # one table = [embed_0 | embed_1 | embed_2 | linear_w]  -> single gather
        "table_cat": jnp.asarray(
            np.concatenate([np.asarray(t, f32) for t in params["embed_tables"]]
                           + [np.asarray(params["linear_w"], f32)], axis=1),
            dtype=compute_dtype),
        "G": jnp.asarray(G, compute_dtype),
        "Ms": jnp.asarray(Ms, compute_dtype),
        "Pc": jnp.asarray(Pc, compute_dtype),
        "b1": jnp.asarray(np.asarray(mp[1], f32), jnp.float32),
        "mask_x": jnp.asarray(mask_x, jnp.float32),
        "mask_h": jnp.asarray(mask_h, jnp.float32),
        "hidden": [],
    }
    for j in range(1, nh):
        pc["hidden"].append(jnp.asarray(np.asarray(mp[2 * j], f32), compute_dtype))
        pc["hidden"].append(jnp.asarray(np.asarray(mp[2 * j + 1], f32), jnp.float32))
    wout = np.asarray(mp[2 * nh], f32)                           # (h_last, 1)
    pc["wout_row"] = jnp.asarray(
        np.concatenate([wout.T, np.ones((1, 1), f32)], axis=1), compute_dtype)
    pc["bias_total"] = jnp.asarray(
        np.asarray(mp[2 * nh + 1], f32) + np.asarray(params["linear_bias"], f32),
        jnp.float32)                                             # (1, 1) -> SMEM
    return pc


def init_params(key):
    def xavier(k, shape):
        fan_in, fan_out = shape[0], shape[-1]
        a = float(np.sqrt(6.0 / (fan_in + fan_out)))
        return jax.random.uniform(k, shape, minval=-a, maxval=a, dtype=jnp.float32)

    keys = iter(jax.random.split(key, 64))
    params = {}
    params["linear_w"] = xavier(next(keys), (INPUT_DIM, 1))
    params["linear_bias"] = jnp.zeros((1, 1), jnp.float32)
    params["embed_tables"] = [xavier(next(keys), (INPUT_DIM, EMBED_DIMS[i]))
                              for i in range(MAX_ORDER)]
    params["hash_wt"] = [xavier(next(keys), (N_LOOKUP, BUCKET_NUMS[i]))
                         for i in range(MAX_ORDER)]
    structure_logits = [
        0.01 * jax.random.normal(next(keys), (N_LOOKUP, BUCKET_NUMS[i], 2),
                                 dtype=jnp.float32)
        for i in range(MAX_ORDER)
    ]
    # fix_structure=True -> structure frozen; precompute the (hard) choice once.
    params["choice"] = [
        gumbel_softmax_choice(structure_logits[i], TEMPERATURE, next(keys))
        for i in range(MAX_ORDER)
    ]

    mlp_params = []
    d_in = MLP_INPUT_DIM
    for h in HIDDEN_DIMS:
        mlp_params.append(xavier(next(keys), (d_in, h)))
        mlp_params.append(jnp.zeros((1, h), jnp.float32))
        d_in = h
    mlp_params.append(xavier(next(keys), (d_in, 1)))
    mlp_params.append(jnp.zeros((1, 1), jnp.float32))
    params["mlp_params"] = mlp_params

    # frozen-structure operands for the fused kernel (computed once, not per forward)
    params["precomp"] = precompute_frozen(params)
    return params


def autogroup_forward_reference(params, feature_id):
    """Pure-JAX f32 reference with the original (unfused) semantics."""
    B = feature_id.shape[0]
    lin_vals = params["linear_w"][feature_id, 0]
    linear_score = jnp.sum(lin_vals, axis=1) + params["linear_bias"][0, 0]
    parts = []
    for i in range(MAX_ORDER):
        order = i + 1
        e = params["embed_tables"][i][feature_id]
        w = params["choice"][i] * params["hash_wt"][i]
        h = jnp.einsum("nk,bnd->bkd", w, e)
        if order == 1:
            parts.append(h.reshape(B, -1))
        else:
            comp = jnp.einsum("nk,bnd->bkd", w ** order, e ** order)
            parts.append(jnp.sum(h ** order - LAMBDA_C * comp, axis=2))
    x = jnp.concatenate(parts, axis=1)
    mp = params["mlp_params"]
    nh = len(HIDDEN_DIMS)
    for j in range(nh):
        x = jnp.maximum(x @ mp[2 * j] + mp[2 * j + 1], 0.0)
    mlp_score = (x @ mp[2 * nh] + mp[2 * nh + 1])[:, 0]
    return linear_score + mlp_score


if __name__ == "__main__":
    key = jax.random.PRNGKey(0)
    pkey, ikey = jax.random.split(key)
    params = init_params(pkey)
    feature_id = jax.random.randint(ikey, (BATCH, N_LOOKUP), 0, INPUT_DIM,
                                    dtype=jnp.int32)

    fwd = jax.jit(autogroup_forward_pallas, static_argnames=("block_b",))
    out = jax.block_until_ready(fwd(params, feature_id))
    ref = jax.block_until_ready(autogroup_forward_reference(params, feature_id))
    assert out.shape == (BATCH,)
    # bf16 MXU operands (f32 accumulation / power chains) vs. pure-f32 reference.
    np.testing.assert_allclose(np.asarray(out), np.asarray(ref),
                               rtol=2e-2, atol=2e-2)

    # also exercise the multi-step (pipelined) grid path
    out2 = jax.block_until_ready(fwd(params, feature_id, block_b=8))
    np.testing.assert_allclose(np.asarray(out2), np.asarray(ref),
                               rtol=2e-2, atol=2e-2)
    print("KERNEL_OK")
</pallas_src>

<mosaic_0001>
module attributes {stable_mosaic.version = 11 : i64} {
  func.func @_autogroup_fused_kernel(%arg0: i32, %arg1: memref<16x200xbf16, #tpu.memory_space<vmem>>, %arg2: memref<200x97xbf16, #tpu.memory_space<vmem>>, %arg3: memref<64x32xbf16, #tpu.memory_space<vmem>>, %arg4: memref<200x32xbf16, #tpu.memory_space<vmem>>, %arg5: memref<1x32xf32, #tpu.memory_space<vmem>>, %arg6: memref<1x200xf32, #tpu.memory_space<vmem>>, %arg7: memref<1x64xf32, #tpu.memory_space<vmem>>, %arg8: memref<32x16xbf16, #tpu.memory_space<vmem>>, %arg9: memref<1x16xf32, #tpu.memory_space<vmem>>, %arg10: memref<1x17xbf16, #tpu.memory_space<vmem>>, %arg11: memref<1x1xf32, #tpu.memory_space<smem>>, %arg12: memref<1x1x16xf32, #tpu.memory_space<vmem>>) attributes {dimension_semantics = [#tpu.dimension_semantics<arbitrary>], iteration_bounds = array<i64: 1>, scalar_prefetch = 0 : i64, scratch_operands = 0 : i64, tpu.core_type = #tpu.core_type<tc>, window_params = [{transform_indices = @transform_0, window_bounds = array<i64: 16, 200>}, {pipeline_mode = #tpu.pipeline_mode<synchronous>, transform_indices = @transform_1, window_bounds = array<i64: 200, 97>}, {pipeline_mode = #tpu.pipeline_mode<synchronous>, transform_indices = @transform_2, window_bounds = array<i64: 64, 32>}, {pipeline_mode = #tpu.pipeline_mode<synchronous>, transform_indices = @transform_3, window_bounds = array<i64: 200, 32>}, {pipeline_mode = #tpu.pipeline_mode<synchronous>, transform_indices = @transform_4, window_bounds = array<i64: 1, 32>}, {pipeline_mode = #tpu.pipeline_mode<synchronous>, transform_indices = @transform_5, window_bounds = array<i64: 1, 200>}, {pipeline_mode = #tpu.pipeline_mode<synchronous>, transform_indices = @transform_6, window_bounds = array<i64: 1, 64>}, {pipeline_mode = #tpu.pipeline_mode<synchronous>, transform_indices = @transform_7, window_bounds = array<i64: 32, 16>}, {pipeline_mode = #tpu.pipeline_mode<synchronous>, transform_indices = @transform_8, window_bounds = array<i64: 1, 16>}, {pipeline_mode = #tpu.pipeline_mode<synchronous>, transform_indices = @transform_9, window_bounds = array<i64: 1, 17>}, {transform_indices = @transform_10, window_bounds = array<i64: 1, 1>}, {transform_indices = @transform_11, window_bounds = array<i64: 1, 1, 16>}]} {
    %c0 = arith.constant 0 : index
    %c0_0 = arith.constant 0 : index
    %0 = vector.load %arg1[%c0, %c0_0] : memref<16x200xbf16, #tpu.memory_space<vmem>>, vector<16x200xbf16>
    %c0_1 = arith.constant 0 : index
    %c0_2 = arith.constant 0 : index
    %1 = vector.load %arg2[%c0_1, %c0_2] : memref<200x97xbf16, #tpu.memory_space<vmem>>, vector<200x97xbf16>
    %cst = arith.constant dense<0.000000e+00> : vector<16x97xf32>
    %2 = tpu.matmul %0, %1, %cst {dimension_numbers = #tpu.dot_dimension_numbers<[1], [0], [0], [1], [0, 0, 1, 1], [], []>} : vector<16x200xbf16>, vector<200x97xbf16>, vector<16x97xf32> -> vector<16x97xf32>
    %3 = arith.extf %0 : vector<16x200xbf16> to vector<16x200xf32>
    %4 = arith.mulf %3, %3 : vector<16x200xf32>
    %c0_3 = arith.constant 0 : index
    %c0_4 = arith.constant 0 : index
    %5 = vector.load %arg6[%c0_3, %c0_4] : memref<1x200xf32, #tpu.memory_space<vmem>>, vector<1x200xf32>
    %cst_5 = arith.constant 0.000000e+00 : f32
    %6 = vector.broadcast %cst_5 : f32 to vector<1x200xf32>
    %7 = arith.cmpf one, %5, %6 : vector<1x200xf32>
    %8 = arith.mulf %4, %3 : vector<16x200xf32>
    %9 = vector.shape_cast %7 : vector<1x200xi1> to vector<1x200xi1>
    %10 = vector.broadcast %9 : vector<1x200xi1> to vector<16x200xi1>
    %11 = arith.select %10, %8, %4 : vector<16x200xi1>, vector<16x200xf32>
    %12 = vector.extract_strided_slice %2 {offsets = [0, 32], sizes = [16, 64], strides = [1, 1]} : vector<16x97xf32> to vector<16x64xf32>
    %13 = arith.mulf %12, %12 : vector<16x64xf32>
    %c0_6 = arith.constant 0 : index
    %c0_7 = arith.constant 0 : index
    %14 = vector.load %arg7[%c0_6, %c0_7] : memref<1x64xf32, #tpu.memory_space<vmem>>, vector<1x64xf32>
    %cst_8 = arith.constant 0.000000e+00 : f32
    %15 = vector.broadcast %cst_8 : f32 to vector<1x64xf32>
    %16 = arith.cmpf one, %14, %15 : vector<1x64xf32>
    %17 = arith.mulf %13, %12 : vector<16x64xf32>
    %18 = vector.shape_cast %16 : vector<1x64xi1> to vector<1x64xi1>
    %19 = vector.broadcast %18 : vector<1x64xi1> to vector<16x64xi1>
    %20 = arith.select %19, %17, %13 : vector<16x64xi1>, vector<16x64xf32>
    %21 = vector.extract_strided_slice %2 {offsets = [0, 0], sizes = [16, 32], strides = [1, 1]} : vector<16x97xf32> to vector<16x32xf32>
    %22 = arith.truncf %20 : vector<16x64xf32> to vector<16x64xbf16>
    %c0_9 = arith.constant 0 : index
    %c0_10 = arith.constant 0 : index
    %23 = vector.load %arg3[%c0_9, %c0_10] : memref<64x32xbf16, #tpu.memory_space<vmem>>, vector<64x32xbf16>
    %cst_11 = arith.constant dense<0.000000e+00> : vector<16x32xf32>
    %24 = tpu.matmul %22, %23, %cst_11 {dimension_numbers = #tpu.dot_dimension_numbers<[1], [0], [0], [1], [0, 0, 1, 1], [], []>} : vector<16x64xbf16>, vector<64x32xbf16>, vector<16x32xf32> -> vector<16x32xf32>
    %25 = arith.addf %21, %24 : vector<16x32xf32>
    %26 = arith.truncf %11 : vector<16x200xf32> to vector<16x200xbf16>
    %c0_12 = arith.constant 0 : index
    %c0_13 = arith.constant 0 : index
    %27 = vector.load %arg4[%c0_12, %c0_13] : memref<200x32xbf16, #tpu.memory_space<vmem>>, vector<200x32xbf16>
    %cst_14 = arith.constant dense<0.000000e+00> : vector<16x32xf32>
    %28 = tpu.matmul %26, %27, %cst_14 {dimension_numbers = #tpu.dot_dimension_numbers<[1], [0], [0], [1], [0, 0, 1, 1], [], []>} : vector<16x200xbf16>, vector<200x32xbf16>, vector<16x32xf32> -> vector<16x32xf32>
    %29 = arith.addf %25, %28 : vector<16x32xf32>
    %c0_15 = arith.constant 0 : index
    %c0_16 = arith.constant 0 : index
    %30 = vector.load %arg5[%c0_15, %c0_16] : memref<1x32xf32, #tpu.memory_space<vmem>>, vector<1x32xf32>
    %31 = vector.broadcast %30 : vector<1x32xf32> to vector<16x32xf32>
    %32 = arith.addf %29, %31 : vector<16x32xf32>
    %cst_17 = arith.constant 0.000000e+00 : f32
    %33 = vector.broadcast %cst_17 : f32 to vector<16x32xf32>
    %34 = arith.maximumf %32, %33 : vector<16x32xf32>
    %c0_18 = arith.constant 0 : index
    %c0_19 = arith.constant 0 : index
    %35 = vector.load %arg8[%c0_18, %c0_19] : memref<32x16xbf16, #tpu.memory_space<vmem>>, vector<32x16xbf16>
    %c0_20 = arith.constant 0 : index
    %c0_21 = arith.constant 0 : index
    %36 = vector.load %arg9[%c0_20, %c0_21] : memref<1x16xf32, #tpu.memory_space<vmem>>, vector<1x16xf32>
    %37 = arith.truncf %34 : vector<16x32xf32> to vector<16x32xbf16>
    %cst_22 = arith.constant dense<0.000000e+00> : vector<16x16xf32>
    %38 = tpu.matmul %37, %35, %cst_22 {dimension_numbers = #tpu.dot_dimension_numbers<[1], [0], [0], [1], [0, 0, 1, 1], [], []>} : vector<16x32xbf16>, vector<32x16xbf16>, vector<16x16xf32> -> vector<16x16xf32>
    %39 = vector.broadcast %36 : vector<1x16xf32> to vector<16x16xf32>
    %40 = arith.addf %38, %39 : vector<16x16xf32>
    %cst_23 = arith.constant 0.000000e+00 : f32
    %41 = vector.broadcast %cst_23 : f32 to vector<16x16xf32>
    %42 = arith.maximumf %40, %41 : vector<16x16xf32>
    %43 = vector.extract_strided_slice %2 {offsets = [0, 96], sizes = [16, 1], strides = [1, 1]} : vector<16x97xf32> to vector<16x1xf32>
    %44 = tpu.concatenate %42, %43 in 1 : vector<16x16xf32>, vector<16x1xf32> -> vector<16x17xf32>
    %45 = arith.truncf %44 : vector<16x17xf32> to vector<16x17xbf16>
    %c0_24 = arith.constant 0 : index
    %c0_25 = arith.constant 0 : index
    %46 = vector.load %arg10[%c0_24, %c0_25] : memref<1x17xbf16, #tpu.memory_space<vmem>>, vector<1x17xbf16>
    %cst_26 = arith.constant dense<0.000000e+00> : vector<1x16xf32>
    %47 = tpu.matmul %46, %45, %cst_26 {dimension_numbers = #tpu.dot_dimension_numbers<[1], [1], [0], [0], [0, 0, 1, 0], [], []>} : vector<1x17xbf16>, vector<16x17xbf16>, vector<1x16xf32> -> vector<1x16xf32>
    %c0_27 = arith.constant 0 : index
    %c0_28 = arith.constant 0 : index
    %48 = memref.load %arg11[%c0_27, %c0_28] : memref<1x1xf32, #tpu.memory_space<smem>>
    %49 = vector.broadcast %48 : f32 to vector<1x16xf32>
    %50 = arith.addf %47, %49 : vector<1x16xf32>
    %51 = vector.shape_cast %50 : vector<1x16xf32> to vector<1x1x16xf32>
    %c0_29 = arith.constant 0 : index
    %c0_30 = arith.constant 0 : index
    %c0_31 = arith.constant 0 : index
    %52 = vector.load %arg12[%c0_29, %c0_30, %c0_31] : memref<1x1x16xf32, #tpu.memory_space<vmem>>, vector<1x1x16xf32>
    tpu.vector_store %arg12[%c0_29, %c0_30, %c0_31], %51 {strides = array<i32>} : memref<1x1x16xf32, #tpu.memory_space<vmem>>, vector<1x1x16xf32>,
    return
  }
  func.func @transform_0(%arg0: i32) -> (i32, i32) {
    %c0_i32 = arith.constant 0 : i32
    %c0_i32_0 = arith.constant 0 : i32
    return %arg0, %c0_i32 : i32, i32
  }
  func.func @transform_1(%arg0: i32) -> (i32, i32) {
    %c0_i32 = arith.constant 0 : i32
    %c0_i32_0 = arith.constant 0 : i32
    %c0_i32_1 = arith.constant 0 : i32
    return %c0_i32, %c0_i32_0 : i32, i32
  }
  func.func @transform_2(%arg0: i32) -> (i32, i32) {
    %c0_i32 = arith.constant 0 : i32
    %c0_i32_0 = arith.constant 0 : i32
    %c0_i32_1 = arith.constant 0 : i32
    return %c0_i32, %c0_i32_0 : i32, i32
  }
  func.func @transform_3(%arg0: i32) -> (i32, i32) {
    %c0_i32 = arith.constant 0 : i32
    %c0_i32_0 = arith.constant 0 : i32
    %c0_i32_1 = arith.constant 0 : i32
    return %c0_i32, %c0_i32_0 : i32, i32
  }
  func.func @transform_4(%arg0: i32) -> (i32, i32) {
    %c0_i32 = arith.constant 0 : i32
    %c0_i32_0 = arith.constant 0 : i32
    %c0_i32_1 = arith.constant 0 : i32
    return %c0_i32, %c0_i32_0 : i32, i32
  }
  func.func @transform_5(%arg0: i32) -> (i32, i32) {
    %c0_i32 = arith.constant 0 : i32
    %c0_i32_0 = arith.constant 0 : i32
    %c0_i32_1 = arith.constant 0 : i32
    return %c0_i32, %c0_i32_0 : i32, i32
  }
  func.func @transform_6(%arg0: i32) -> (i32, i32) {
    %c0_i32 = arith.constant 0 : i32
    %c0_i32_0 = arith.constant 0 : i32
    %c0_i32_1 = arith.constant 0 : i32
    return %c0_i32, %c0_i32_0 : i32, i32
  }
  func.func @transform_7(%arg0: i32) -> (i32, i32) {
    %c0_i32 = arith.constant 0 : i32
    %c0_i32_0 = arith.constant 0 : i32
    %c0_i32_1 = arith.constant 0 : i32
    return %c0_i32, %c0_i32_0 : i32, i32
  }
  func.func @transform_8(%arg0: i32) -> (i32, i32) {
    %c0_i32 = arith.constant 0 : i32
    %c0_i32_0 = arith.constant 0 : i32
    %c0_i32_1 = arith.constant 0 : i32
    return %c0_i32, %c0_i32_0 : i32, i32
  }
  func.func @transform_9(%arg0: i32) -> (i32, i32) {
    %c0_i32 = arith.constant 0 : i32
    %c0_i32_0 = arith.constant 0 : i32
    %c0_i32_1 = arith.constant 0 : i32
    return %c0_i32, %c0_i32_0 : i32, i32
  }
  func.func @transform_10(%arg0: i32) -> (i32, i32) {
    %c0_i32 = arith.constant 0 : i32
    %c0_i32_0 = arith.constant 0 : i32
    %c0_i32_1 = arith.constant 0 : i32
    return %c0_i32, %c0_i32_0 : i32, i32
  }
  func.func @transform_11(%arg0: i32) -> (i32, i32, i32) {
    %c0_i32 = arith.constant 0 : i32
    %c0_i32_0 = arith.constant 0 : i32
    %c0_i32_1 = arith.constant 0 : i32
    return %arg0, %c0_i32, %c0_i32_0 : i32, i32, i32
  }
}

</mosaic_0001>

<llo_original>
// kernel: autogroup_forward_pallas.1
$region0: #{autogroup_forward_pallas.1}
  #allocation0 [shape = 'u32[]', space=smem, size = 0x4, offset = 0x4, fixed_abs, tag = 'smem constant byte address 0x4 - core index']
  #allocation1 [shape = 'u32[144,128]{1,0:T(1,128)}', space=vmem, size = 0x12000, scoped, tag = 'internal scratch']
  #allocation2 [shape = 'f32[1,1]{1,0:T(1,128)S(6)}', space=smem, size = 0x200, scoped, tag = 'scoped memory for autogroup_forward_pallas.1']
  %s0 = inlined_call_operand.vmem [shape: bf16[16,200], index: 0, kind: input, shape index: {}]
  %s1 = inlined_call_operand.vmem [shape: bf16[200,97], index: 1, kind: input, shape index: {}]
  %s2 = inlined_call_operand.vmem [shape: bf16[64,32], index: 2, kind: input, shape index: {}]
  %s3 = inlined_call_operand.vmem [shape: bf16[200,32], index: 3, kind: input, shape index: {}]
  %s4 = inlined_call_operand.vmem [shape: f32[1,32], index: 4, kind: input, shape index: {}]
  %s5 = inlined_call_operand.vmem [shape: f32[1,200], index: 5, kind: input, shape index: {}]
  %s6 = inlined_call_operand.vmem [shape: f32[1,64], index: 6, kind: input, shape index: {}]
  %s7 = inlined_call_operand.vmem [shape: bf16[32,16], index: 7, kind: input, shape index: {}]
  %s8 = inlined_call_operand.vmem [shape: f32[1,16], index: 8, kind: input, shape index: {}]
  %s9 = inlined_call_operand.vmem [shape: bf16[1,17], index: 9, kind: input, shape index: {}]
  %s10 = inlined_call_operand.<no memory space> [shape: f32[1,1], index: 10, kind: input, shape index: {}]
  %s11 = inlined_call_operand.hbm [shape: f32[1,1,16], index: 11, kind: output, shape index: {}]
  %s12 = sld [smem:[#allocation0]]
  $region54: #{autogroup_forward_pallas.1} parent=0
    _
  %s14 = ssub.s32 1, %s12
  %s15 = scalar_select 0, %s14, %s12
  %16 = sst [smem:[#allocation2]] %s10
  $region1: #{autogroup_forward_pallas.1} parent=0
    #allocation3 [shape = 'u8[512]{0}', space=vmem, size = 0x400, scoped, tag = 'output window, operand 0, single buffered']
    #allocation4 [shape = 's32[1]{0}', space=sflag, size = 0x4, scoped, tag = 'scoped memory for autogroup_forward_pallas.1']
    %17 = vsyncpa [#allocation4], 0
    // Predicated region
    $region2: #{autogroup_forward_pallas.1} parent=1 // pred_check
      _
    $region3: #{autogroup_forward_pallas.1} parent=1 // pred_check_branch
      %19 = sbr.rel (0) target = $region5
    $region4: #{autogroup_forward_pallas.1} parent=1 // pred_region
      _
    $region5: #{autogroup_forward_pallas.1} parent=1 // pred_fallthru
      _
    // Predicated region
    $region6: #{autogroup_forward_pallas.1} parent=1 // pred_check
      _
    $region7: #{autogroup_forward_pallas.1} parent=1 // pred_check_branch
      %21 = sbr.rel (0) target = $region9
    $region8: #{autogroup_forward_pallas.1} parent=1 // pred_region
      _
    $region9: #{autogroup_forward_pallas.1} parent=1 // pred_fallthru
      _
    // Predicated region
    $region10: #{autogroup_forward_pallas.1} parent=1 // pred_check
      _
    $region11: #{autogroup_forward_pallas.1} parent=1 // pred_check_branch
      %23 = sbr.rel (0) target = $region13
    $region12: #{autogroup_forward_pallas.1} parent=1 // pred_region
      _
    $region13: #{autogroup_forward_pallas.1} parent=1 // pred_fallthru
      _
    // Predicated region
    $region14: #{autogroup_forward_pallas.1} parent=1 // pred_check
      _
    $region15: #{autogroup_forward_pallas.1} parent=1 // pred_check_branch
      %25 = sbr.rel (0) target = $region17
    $region16: #{autogroup_forward_pallas.1} parent=1 // pred_region
      _
    $region17: #{autogroup_forward_pallas.1} parent=1 // pred_fallthru
      _
    // Predicated region
    $region18: #{autogroup_forward_pallas.1} parent=1 // pred_check
      _
    $region19: #{autogroup_forward_pallas.1} parent=1 // pred_check_branch
      %27 = sbr.rel (0) target = $region21
    $region20: #{autogroup_forward_pallas.1} parent=1 // pred_region
      _
    $region21: #{autogroup_forward_pallas.1} parent=1 // pred_fallthru
      _
    // Predicated region
    $region22: #{autogroup_forward_pallas.1} parent=1 // pred_check
      _
    $region23: #{autogroup_forward_pallas.1} parent=1 // pred_check_branch
      %29 = sbr.rel (0) target = $region25
    $region24: #{autogroup_forward_pallas.1} parent=1 // pred_region
      _
    $region25: #{autogroup_forward_pallas.1} parent=1 // pred_fallthru
      _
    // Predicated region
    $region26: #{autogroup_forward_pallas.1} parent=1 // pred_check
      _
    $region27: #{autogroup_forward_pallas.1} parent=1 // pred_check_branch
      %31 = sbr.rel (0) target = $region29
    $region28: #{autogroup_forward_pallas.1} parent=1 // pred_region
      _
    $region29: #{autogroup_forward_pallas.1} parent=1 // pred_fallthru
      _
    // Predicated region
    $region30: #{autogroup_forward_pallas.1} parent=1 // pred_check
      _
    $region31: #{autogroup_forward_pallas.1} parent=1 // pred_check_branch
      %33 = sbr.rel (0) target = $region33
    $region32: #{autogroup_forward_pallas.1} parent=1 // pred_region
      _
    $region33: #{autogroup_forward_pallas.1} parent=1 // pred_fallthru
      _
    // Predicated region
    $region34: #{autogroup_forward_pallas.1} parent=1 // pred_check
      _
    $region35: #{autogroup_forward_pallas.1} parent=1 // pred_check_branch
      %35 = sbr.rel (0) target = $region37
    $region36: #{autogroup_forward_pallas.1} parent=1 // pred_region
      _
    $region37: #{autogroup_forward_pallas.1} parent=1 // pred_fallthru
      _
    // Predicated region
    $region38: #{autogroup_forward_pallas.1} parent=1 // pred_check
      _
    $region39: #{autogroup_forward_pallas.1} parent=1 // pred_check_branch
      %37 = sbr.rel (0) target = $region41
    $region40: #{autogroup_forward_pallas.1} parent=1 // pred_region
      _
    $region41: #{autogroup_forward_pallas.1} parent=1 // pred_fallthru
      _
    // Predicated region
    $region42: #{autogroup_forward_pallas.1} parent=1 // pred_check
      _
    $region43: #{autogroup_forward_pallas.1} parent=1 // pred_check_branch
      %39 = sbr.rel (0) target = $region45
    $region44: #{autogroup_forward_pallas.1} parent=1 // pred_region
      _
    $region45: #{autogroup_forward_pallas.1} parent=1 // pred_fallthru
      _
    %v41 = vld [vmem:[%s0] sm:$0xff]
    %v42 = vld [vmem:[%s0 + $0x8] sm:$0xff]
    %v43 = vld [vmem:[%s1] sm:$0xf]
    %v44 = vld [vmem:[%s1 + $0x4] sm:$0xf]
    %v45 = vld [vmem:[%s1 + $0x8] sm:$0xf]
    %v46 = vld [vmem:[%s1 + $0xc] sm:$0xf]
    %v47 = vld [vmem:[%s1 + $0x10] sm:$0xf]
    %v48 = vld [vmem:[%s1 + $0x14] sm:$0xf]
    %v49 = vld [vmem:[%s1 + $0x18] sm:$0xf]
    %v50 = vld [vmem:[%s1 + $0x1c] sm:$0xf]
    %v51 = vld [vmem:[%s1 + $0x20] sm:$0xf]
    %v52 = vld [vmem:[%s1 + $0x24] sm:$0xf]
    %v53 = vld [vmem:[%s1 + $0x28] sm:$0xf]
    %v54 = vld [vmem:[%s1 + $0x2c] sm:$0xf]
    %v55 = vld [vmem:[%s1 + $0x30] sm:$0xf]
    %v56 = vld [vmem:[%s1 + $0x34] sm:$0xf]
    %v57 = vld [vmem:[%s1 + $0x38] sm:$0xf]
    %v58 = vld [vmem:[%s1 + $0x3c] sm:$0xf]
    %v59 = vld [vmem:[%s1 + $0x40] sm:$0xf]
    %v60 = vld [vmem:[%s1 + $0x44] sm:$0xf]
    %v61 = vld [vmem:[%s1 + $0x48] sm:$0xf]
    %v62 = vld [vmem:[%s1 + $0x4c] sm:$0xf]
    %v63 = vld [vmem:[%s1 + $0x50] sm:$0xf]
    %v64 = vld [vmem:[%s1 + $0x54] sm:$0xf]
    %v65 = vld [vmem:[%s1 + $0x58] sm:$0xf]
    %v66 = vld [vmem:[%s1 + $0x5c] sm:$0xf]
    %v67 = vld [vmem:[%s1 + $0x60] sm:$0xf]
    %v70 = vunpack.c.l.b16 %v41
    %v71 = vunpack.c.h.b16 %v41
    %v72 = vunpack.c.l.b16 %v42
    %v73 = vunpack.c.h.b16 %v42
    %v74 = vpack.c.b16 %v72, %v70
    %v75 = vpack.c.b16 %v73, %v71
    %v102 = vunpack.c.l.b16 %v43
    %v103 = vunpack.c.l.b16 %v44
    %v104 = vunpack.c.l.b16 %v45
    %v105 = vunpack.c.l.b16 %v46
    %v106 = vunpack.c.l.b16 %v47
    %v107 = vunpack.c.l.b16 %v48
    %v108 = vunpack.c.l.b16 %v49
    %v109 = vunpack.c.l.b16 %v50
    %v110 = vunpack.c.l.b16 %v51
    %v111 = vunpack.c.l.b16 %v52
    %v112 = vunpack.c.l.b16 %v53
    %v113 = vunpack.c.l.b16 %v54
    %v114 = vunpack.c.l.b16 %v55
    %v115 = vunpack.c.l.b16 %v56
    %v116 = vunpack.c.l.b16 %v57
    %v117 = vunpack.c.l.b16 %v58
    %v118 = vunpack.c.l.b16 %v59
    %v119 = vunpack.c.l.b16 %v60
    %v120 = vunpack.c.l.b16 %v61
    %v121 = vunpack.c.l.b16 %v62
    %v122 = vunpack.c.l.b16 %v63
    %v123 = vunpack.c.l.b16 %v64
    %v124 = vunpack.c.l.b16 %v65
    %v125 = vunpack.c.l.b16 %v66
    %v126 = vunpack.c.l.b16 %v67
    %v127 = vpack.c.b16 %v103, %v102
    %v128 = vpack.c.b16 %v105, %v104
    %v129 = vpack.c.b16 %v107, %v106
    %v130 = vpack.c.b16 %v109, %v108
    %v131 = vpack.c.b16 %v111, %v110
    %v132 = vpack.c.b16 %v113, %v112
    %v133 = vpack.c.b16 %v115, %v114
    %v134 = vpack.c.b16 %v117, %v116
    %v135 = vpack.c.b16 %v119, %v118
    %v136 = vpack.c.b16 %v121, %v120
    %v137 = vpack.c.b16 %v123, %v122
    %v138 = vpack.c.b16 %v125, %v124
    %v139 = vpack.c.b16 %v126, %v126
    %vm152 = vcmask 588800
    %v154 = vsel %vm152, %v75, 0
    %vm156 = vcmask 1043456
    %v158 = vsel %vm156, %v139, 0
    %160 = vmatprep.subr.bf16.mxu0 0
    %161 = vmatpush1.bf16.msra.mxu0 %v127
    %162 = vmatprep.subr.bf16.mxu0 0
    %163 = vmatpush1.bf16.msra.mxu0 %v128
    %164 = vmatprep.subr.bf16.mxu0 0
    %165 = vmatpush1.bf16.msra.mxu0 %v129
    %166 = vmatprep.subr.bf16.mxu0 0
    %167 = vmatpush1.bf16.msra.mxu0 %v130
    %168 = vmatprep.subr.bf16.mxu0 0
    %169 = vmatpush1.bf16.msra.mxu0 %v131
    %170 = vmatprep.subr.bf16.mxu0 0
    %171 = vmatpush1.bf16.msra.mxu0 %v132
    %172 = vmatprep.subr.bf16.mxu0 0
    %173 = vmatpush1.bf16.msra.mxu0 %v133
    %174 = vmatprep.subr.bf16.mxu0 0
    %175 = vmatpush1.bf16.msra.mxu0 %v134
    %176 = vmatprep.subr.bf16.mxu0 0
    %177 = vmatpush1.bf16.msra.mxu0 %v135
    %178 = vmatprep.subr.bf16.mxu0 0
    %179 = vmatpush1.bf16.msra.mxu0 %v136
    %180 = vmatprep.subr.bf16.mxu0 0
    %181 = vmatpush1.bf16.msra.mxu0 %v137
    %182 = vmatprep.subr.bf16.mxu0 0
    %183 = vmatpush1.bf16.msra.mxu0 %v138
    %184 = vmatprep.subr.bf16.mxu0 0
    %185 = vmatpush1.bf16.msra.mxu0 %v158
    %186 = vmatprep.subr.bf16.mxu0 0
    %187 = vmatpush1.bf16.msra.mxu0 0
    %188 = vmatprep.subr.bf16.mxu0 0
    %189 = vmatpush1.bf16.msra.mxu0 0
    %190 = vmatprep.subr.bf16.mxu0 0
    %191 = vmatpush1.bf16.msra.mxu0 0
    %192 = vmatprep.mubr.bf16.mxu0 %v154
    %193 = vmatmul.mubr.bf16.gmra.mrb[0].mxu0 %v74
    %v194 = vpop.f32.mrb[0].mxu0
    %v195 = vadd.f32 0.0, %v194
    %v196 = vpop.f32.mrb[0].mxu0
    %v197 = vpop.f32.mrb[0].mxu0
    %v198 = vadd.f32 0.0, %v197
    %v199 = vpop.f32.mrb[0].mxu0
    %200 = vdwg.mxu0
    %v201 = vunpack.c.l.bf16 %v41
    %v202 = vunpack.c.h.bf16 %v41
    %v203 = vunpack.c.l.bf16 %v42
    %v204 = vunpack.c.h.bf16 %v42
    %v205 = vmul.f32 %v201, %v201
    %v206 = vmul.f32 %v202, %v202
    %v207 = vmul.f32 %v203, %v203
    %v208 = vmul.f32 %v204, %v204
    %v209 = vld [vmem:[%s5] sm:$0x3]
    %vm210 = vcmp.ne.f32.partialorder %v209, 0.0
    %v211 = vmul.f32 %v205, %v201
    %v212 = vmul.f32 %v206, %v202
    %v213 = vmul.f32 %v207, %v203
    %v214 = vmul.f32 %v208, %v204
    %v215 = vsel %vm210, 1, 0
    %v216 = vlaneseq
    %v217 = vshrl.u32 %v216, 7
    %v218 = vsub.s32 0, %v217
    %v219 = vrot.slane %v215, %v218
    %v220 = vlaneseq
    %v221 = vshrl.u32 %v220, 7
    %v222 = vsub.s32 1, %v221
    %v223 = vrot.slane %v215, %v222
    %vm224 = vcmp.eq.s32.totalorder %v219, 1
    %vm225 = vcmp.eq.s32.totalorder %v223, 1
    %v226 = vsel %vm224, %v211, %v205
    %v227 = vsel %vm225, %v212, %v206
    %v228 = vsel %vm224, %v213, %v207
    %v229 = vsel %vm225, %v214, %v208
    %v230 = vmul.f32 %v195, %v195
    %v231 = vmul.f32 %v198, %v198
    %v232 = vld [vmem:[%s6] sm:$0x1]
    %vm233 = vcmp.ne.f32.partialorder %v232, 0.0
    %v234 = vmul.f32 %v230, %v195
    %v235 = vmul.f32 %v231, %v198
    %v236 = vsel %vm233, 1, 0
    %v237 = vlaneseq
    %v238 = vshrl.u32 %v237, 7
    %v239 = vsub.s32 0, %v238
    %v240 = vrot.slane %v236, %v239
    %vm241 = vcmp.eq.s32.totalorder %v240, 1
    %244 = vrot.lane.b32.xlu0 %v234, 96
    %v245 = vpop.permute.xlu0 %244
    %246 = vrot.lane.b32.xlu0 %v235, 96
    %v247 = vpop.permute.xlu0 %246
    %252 = vrot.lane.b32.xlu0 %v230, 96
    %v253 = vpop.permute.xlu0 %252
    %254 = vrot.lane.b32.xlu0 %v231, 96
    %v255 = vpop.permute.xlu0 %254
    %v258 = vsel %vm241, %v245, %v253
    %v259 = vsel %vm241, %v247, %v255
    %v260 = vpack.c.bf16 %v259, %v258
    %v261 = vld [vmem:[%s2] sm:$0xf]
    %v262 = vld [vmem:[%s2 + $0x4] sm:$0xf]
    %v263 = vld [vmem:[%s2 + $0x8] sm:$0xf]
    %v264 = vld [vmem:[%s2 + $0xc] sm:$0xf]
    %v265 = vld [vmem:[%s2 + $0x10] sm:$0xf]
    %v266 = vld [vmem:[%s2 + $0x14] sm:$0xf]
    %v267 = vld [vmem:[%s2 + $0x18] sm:$0xf]
    %v268 = vld [vmem:[%s2 + $0x1c] sm:$0xf]
    %v277 = vunpack.c.l.b16 %v261
    %v278 = vunpack.c.l.b16 %v262
    %v279 = vunpack.c.l.b16 %v263
    %v280 = vunpack.c.l.b16 %v264
    %v281 = vunpack.c.l.b16 %v265
    %v282 = vunpack.c.l.b16 %v266
    %v283 = vunpack.c.l.b16 %v267
    %v284 = vunpack.c.l.b16 %v268
    %v285 = vpack.c.b16 %v278, %v277
    %v286 = vpack.c.b16 %v280, %v279
    %v287 = vpack.c.b16 %v282, %v281
    %v288 = vpack.c.b16 %v284, %v283
    %vm293 = vcmask 523264
    %v295 = vsel %vm293, %v260, 0
    %297 = vmatprep.subr.bf16.mxu0 0
    %298 = vmatpush1.bf16.msra.mxu0 %v285
    %299 = vmatprep.subr.bf16.mxu0 0
    %300 = vmatpush1.bf16.msra.mxu0 %v286
    %301 = vmatprep.subr.bf16.mxu0 0
    %302 = vmatpush1.bf16.msra.mxu0 %v287
    %303 = vmatprep.subr.bf16.mxu0 0
    %304 = vmatpush1.bf16.msra.mxu0 %v288
    %305 = vmatprep.subr.bf16.mxu0 0
    %306 = vmatpush1.bf16.msra.mxu0 0
    %307 = vmatprep.subr.bf16.mxu0 0
    %308 = vmatpush1.bf16.msra.mxu0 0
    %309 = vmatprep.subr.bf16.mxu0 0
    %310 = vmatpush1.bf16.msra.mxu0 0
    %311 = vmatprep.subr.bf16.mxu0 0
    %312 = vmatpush1.bf16.msra.mxu0 0
    %313 = vmatprep.subr.bf16.mxu0 0
    %314 = vmatpush1.bf16.msra.mxu0 0
    %315 = vmatprep.subr.bf16.mxu0 0
    %316 = vmatpush1.bf16.msra.mxu0 0
    %317 = vmatprep.subr.bf16.mxu0 0
    %318 = vmatpush1.bf16.msra.mxu0 0
    %319 = vmatprep.subr.bf16.mxu0 0
    %320 = vmatpush1.bf16.msra.mxu0 0
    %321 = vmatprep.subr.bf16.mxu0 0
    %322 = vmatpush1.bf16.msra.mxu0 0
    %323 = vmatprep.subr.bf16.mxu0 0
    %324 = vmatpush1.bf16.msra.mxu0 0
    %325 = vmatprep.subr.bf16.mxu0 0
    %326 = vmatpush1.bf16.msra.mxu0 0
    %327 = vmatprep.subr.bf16.mxu0 0
    %328 = vmatpush1.bf16.msra.mxu0 0
    %329 = vmatprep.mubr.bf16.mxu0 0
    %330 = vmatmul.mubr.bf16.gmra.mrb[0].mxu0 %v295
    %v331 = vpop.f32.mrb[0].mxu0
    %v332 = vadd.f32 0.0, %v331
    %v333 = vpop.f32.mrb[0].mxu0
    %v334 = vpop.f32.mrb[0].mxu0
    %v335 = vadd.f32 0.0, %v334
    %v336 = vpop.f32.mrb[0].mxu0
    %337 = vdwg.mxu0
    %v338 = vadd.f32 %v195, %v332
    %v339 = vadd.f32 %v198, %v335
    %v340 = vpack.c.bf16 %v228, %v226
    %v341 = vpack.c.bf16 %v229, %v227
    %v342 = vld [vmem:[%s3] sm:$0xf]
    %v343 = vld [vmem:[%s3 + $0x4] sm:$0xf]
    %v344 = vld [vmem:[%s3 + $0x8] sm:$0xf]
    %v345 = vld [vmem:[%s3 + $0xc] sm:$0xf]
    %v346 = vld [vmem:[%s3 + $0x10] sm:$0xf]
    %v347 = vld [vmem:[%s3 + $0x14] sm:$0xf]
    %v348 = vld [vmem:[%s3 + $0x18] sm:$0xf]
    %v349 = vld [vmem:[%s3 + $0x1c] sm:$0xf]
    %v350 = vld [vmem:[%s3 + $0x20] sm:$0xf]
    %v351 = vld [vmem:[%s3 + $0x24] sm:$0xf]
    %v352 = vld [vmem:[%s3 + $0x28] sm:$0xf]
    %v353 = vld [vmem:[%s3 + $0x2c] sm:$0xf]
    %v354 = vld [vmem:[%s3 + $0x30] sm:$0xf]
    %v355 = vld [vmem:[%s3 + $0x34] sm:$0xf]
    %v356 = vld [vmem:[%s3 + $0x38] sm:$0xf]
    %v357 = vld [vmem:[%s3 + $0x3c] sm:$0xf]
    %v358 = vld [vmem:[%s3 + $0x40] sm:$0xf]
    %v359 = vld [vmem:[%s3 + $0x44] sm:$0xf]
    %v360 = vld [vmem:[%s3 + $0x48] sm:$0xf]
    %v361 = vld [vmem:[%s3 + $0x4c] sm:$0xf]
    %v362 = vld [vmem:[%s3 + $0x50] sm:$0xf]
    %v363 = vld [vmem:[%s3 + $0x54] sm:$0xf]
    %v364 = vld [vmem:[%s3 + $0x58] sm:$0xf]
    %v365 = vld [vmem:[%s3 + $0x5c] sm:$0xf]
    %v366 = vld [vmem:[%s3 + $0x60] sm:$0xf]
    %v392 = vunpack.c.l.b16 %v342
    %v393 = vunpack.c.l.b16 %v343
    %v394 = vunpack.c.l.b16 %v344
    %v395 = vunpack.c.l.b16 %v345
    %v396 = vunpack.c.l.b16 %v346
    %v397 = vunpack.c.l.b16 %v347
    %v398 = vunpack.c.l.b16 %v348
    %v399 = vunpack.c.l.b16 %v349
    %v400 = vunpack.c.l.b16 %v350
    %v401 = vunpack.c.l.b16 %v351
    %v402 = vunpack.c.l.b16 %v352
    %v403 = vunpack.c.l.b16 %v353
    %v404 = vunpack.c.l.b16 %v354
    %v405 = vunpack.c.l.b16 %v355
    %v406 = vunpack.c.l.b16 %v356
    %v407 = vunpack.c.l.b16 %v357
    %v408 = vunpack.c.l.b16 %v358
    %v409 = vunpack.c.l.b16 %v359
    %v410 = vunpack.c.l.b16 %v360
    %v411 = vunpack.c.l.b16 %v361
    %v412 = vunpack.c.l.b16 %v362
    %v413 = vunpack.c.l.b16 %v363
    %v414 = vunpack.c.l.b16 %v364
    %v415 = vunpack.c.l.b16 %v365
    %v416 = vunpack.c.l.b16 %v366
    %v417 = vpack.c.b16 %v393, %v392
    %v418 = vpack.c.b16 %v395, %v394
    %v419 = vpack.c.b16 %v397, %v396
    %v420 = vpack.c.b16 %v399, %v398
    %v421 = vpack.c.b16 %v401, %v400
    %v422 = vpack.c.b16 %v403, %v402
    %v423 = vpack.c.b16 %v405, %v404
    %v424 = vpack.c.b16 %v407, %v406
    %v425 = vpack.c.b16 %v409, %v408
    %v426 = vpack.c.b16 %v411, %v410
    %v427 = vpack.c.b16 %v413, %v412
    %v428 = vpack.c.b16 %v415, %v414
    %v429 = vpack.c.b16 %v416, %v416
    %v443 = vsel %vm152, %v341, 0
    %v446 = vsel %vm156, %v429, 0
    %448 = vmatprep.subr.bf16.mxu0 0
    %449 = vmatpush1.bf16.msra.mxu0 %v417
    %450 = vmatprep.subr.bf16.mxu0 0
    %451 = vmatpush1.bf16.msra.mxu0 %v418
    %452 = vmatprep.subr.bf16.mxu0 0
    %453 = vmatpush1.bf16.msra.mxu0 %v419
    %454 = vmatprep.subr.bf16.mxu0 0
    %455 = vmatpush1.bf16.msra.mxu0 %v420
    %456 = vmatprep.subr.bf16.mxu0 0
    %457 = vmatpush1.bf16.msra.mxu0 %v421
    %458 = vmatprep.subr.bf16.mxu0 0
    %459 = vmatpush1.bf16.msra.mxu0 %v422
    %460 = vmatprep.subr.bf16.mxu0 0
    %461 = vmatpush1.bf16.msra.mxu0 %v423
    %462 = vmatprep.subr.bf16.mxu0 0
    %463 = vmatpush1.bf16.msra.mxu0 %v424
    %464 = vmatprep.subr.bf16.mxu0 0
    %465 = vmatpush1.bf16.msra.mxu0 %v425
    %466 = vmatprep.subr.bf16.mxu0 0
    %467 = vmatpush1.bf16.msra.mxu0 %v426
    %468 = vmatprep.subr.bf16.mxu0 0
    %469 = vmatpush1.bf16.msra.mxu0 %v427
    %470 = vmatprep.subr.bf16.mxu0 0
    %471 = vmatpush1.bf16.msra.mxu0 %v428
    %472 = vmatprep.subr.bf16.mxu0 0
    %473 = vmatpush1.bf16.msra.mxu0 %v446
    %474 = vmatprep.subr.bf16.mxu0 0
    %475 = vmatpush1.bf16.msra.mxu0 0
    %476 = vmatprep.subr.bf16.mxu0 0
    %477 = vmatpush1.bf16.msra.mxu0 0
    %478 = vmatprep.subr.bf16.mxu0 0
    %479 = vmatpush1.bf16.msra.mxu0 0
    %480 = vmatprep.mubr.bf16.mxu0 %v443
    %481 = vmatmul.mubr.bf16.gmra.mrb[0].mxu0 %v340
    %v482 = vpop.f32.mrb[0].mxu0
    %v483 = vadd.f32 0.0, %v482
    %v484 = vpop.f32.mrb[0].mxu0
    %v485 = vpop.f32.mrb[0].mxu0
    %v486 = vadd.f32 0.0, %v485
    %v487 = vpop.f32.mrb[0].mxu0
    %488 = vdwg.mxu0
    %v489 = vadd.f32 %v338, %v483
    %v490 = vadd.f32 %v339, %v486
    %v491 = vld [vmem:[%s4] sm:$0x1]
    %v493 = vlaneseq
    %v494 = vshrl.u32 %v493, 7
    %v495 = vsub.s32 0, %v494
    %v496 = vrot.slane %v491, %v495
    %v498 = vadd.f32 %v489, %v496
    %v499 = vadd.f32 %v490, %v496
    %v500 = vmax.f32 %v498, 0.0
    %v501 = vmax.f32 %v499, 0.0
    %v502 = vld [vmem:[%s7] sm:$0xf]
    %v503 = vld [vmem:[%s7 + $0x4] sm:$0xf]
    %v504 = vld [vmem:[%s7 + $0x8] sm:$0xf]
    %v505 = vld [vmem:[%s7 + $0xc] sm:$0xf]
    %v506 = vld [vmem:[%s8] sm:$0x1]
    %v507 = vpack.c.bf16 %v501, %v500
    %v509 = vlaneseq
    %v510 = vshrl.u32 %v509, 7
    %v511 = vsub.s32 0, %v510
    %v512 = vrot.slane %v506, %v511
    %v518 = vunpack.c.l.b16 %v502
    %v519 = vunpack.c.l.b16 %v503
    %v520 = vunpack.c.l.b16 %v504
    %v521 = vunpack.c.l.b16 %v505
    %v522 = vpack.c.b16 %v519, %v518
    %v523 = vpack.c.b16 %v521, %v520
    %vm526 = vcmask 261120
    %v528 = vsel %vm526, %v507, 0
    %530 = vmatprep.subr.bf16.mxu0 0
    %531 = vmatpush1.bf16.msra.mxu0 %v522
    %532 = vmatprep.subr.bf16.mxu0 0
    %533 = vmatpush1.bf16.msra.mxu0 %v523
    %534 = vmatprep.subr.bf16.mxu0 0
    %535 = vmatpush1.bf16.msra.mxu0 0
    %536 = vmatprep.subr.bf16.mxu0 0
    %537 = vmatpush1.bf16.msra.mxu0 0
    %538 = vmatprep.subr.bf16.mxu0 0
    %539 = vmatpush1.bf16.msra.mxu0 0
    %540 = vmatprep.subr.bf16.mxu0 0
    %541 = vmatpush1.bf16.msra.mxu0 0
    %542 = vmatprep.subr.bf16.mxu0 0
    %543 = vmatpush1.bf16.msra.mxu0 0
    %544 = vmatprep.subr.bf16.mxu0 0
    %545 = vmatpush1.bf16.msra.mxu0 0
    %546 = vmatprep.subr.bf16.mxu0 0
    %547 = vmatpush1.bf16.msra.mxu0 0
    %548 = vmatprep.subr.bf16.mxu0 0
    %549 = vmatpush1.bf16.msra.mxu0 0
    %550 = vmatprep.subr.bf16.mxu0 0
    %551 = vmatpush1.bf16.msra.mxu0 0
    %552 = vmatprep.subr.bf16.mxu0 0
    %553 = vmatpush1.bf16.msra.mxu0 0
    %554 = vmatprep.subr.bf16.mxu0 0
    %555 = vmatpush1.bf16.msra.mxu0 0
    %556 = vmatprep.subr.bf16.mxu0 0
    %557 = vmatpush1.bf16.msra.mxu0 0
    %558 = vmatprep.subr.bf16.mxu0 0
    %559 = vmatpush1.bf16.msra.mxu0 0
    %560 = vmatprep.subr.bf16.mxu0 0
    %561 = vmatpush1.bf16.msra.mxu0 0
    %562 = vmatprep.mubr.bf16.mxu0 0
    %563 = vmatmul.mubr.bf16.gmra.mrb[0].mxu0 %v528
    %v564 = vpop.f32.mrb[0].mxu0
    %v565 = vadd.f32 %v512, %v564
    %v566 = vpop.f32.mrb[0].mxu0
    %v567 = vpop.f32.mrb[0].mxu0
    %v568 = vadd.f32 %v512, %v567
    %v569 = vpop.f32.mrb[0].mxu0
    %570 = vdwg.mxu0
    %v571 = vmax.f32 %v565, 0.0
    %v572 = vmax.f32 %v568, 0.0
    %575 = vrot.lane.b32.xlu0 %v195, 48
    %v576 = vpop.permute.xlu0 %575
    %577 = vrot.lane.b32.xlu0 %v198, 48
    %v578 = vpop.permute.xlu0 %577
    %vm581 = vcmask 130048
    %v582 = vsel %vm581, %v571, %v576
    %v583 = vsel %vm581, %v572, %v578
    %v584 = vpack.c.bf16 %v583, %v582
    %v585 = vld [vmem:[%s9] sm:$0x1]
    %s586 = sld [smem:[#allocation2]]
    %v587 = vstv %s586
    %vm588 = vcmask 138240
    %v590 = vsel %vm588, %v585, 0
    %v593 = vsel %vm588, %v584, 0
    %595 = vmatprep.subr.bf16.mxu0 0
    %596 = vmatpush1.bf16.xpose.msra.mxu0 %v593
    %597 = vmatprep.subr.bf16.mxu0 0
    %598 = vmatpush1.bf16.xpose.msra.mxu0 0
    %599 = vmatprep.subr.bf16.mxu0 0
    %600 = vmatpush1.bf16.xpose.msra.mxu0 0
    %601 = vmatprep.subr.bf16.mxu0 0
    %602 = vmatpush1.bf16.xpose.msra.mxu0 0
    %603 = vmatprep.subr.bf16.mxu0 0
    %604 = vmatpush1.bf16.xpose.msra.mxu0 0
    %605 = vmatprep.subr.bf16.mxu0 0
    %606 = vmatpush1.bf16.xpose.msra.mxu0 0
    %607 = vmatprep.subr.bf16.mxu0 0
    %608 = vmatpush1.bf16.xpose.msra.mxu0 0
    %609 = vmatprep.subr.bf16.mxu0 0
    %610 = vmatpush1.bf16.xpose.msra.mxu0 0
    %611 = vmatprep.subr.bf16.mxu0 0
    %612 = vmatpush1.bf16.xpose.msra.mxu0 0
    %613 = vmatprep.subr.bf16.mxu0 0
    %614 = vmatpush1.bf16.xpose.msra.mxu0 0
    %615 = vmatprep.subr.bf16.mxu0 0
    %616 = vmatpush1.bf16.xpose.msra.mxu0 0
    %617 = vmatprep.subr.bf16.mxu0 0
    %618 = vmatpush1.bf16.xpose.msra.mxu0 0
    %619 = vmatprep.subr.bf16.mxu0 0
    %620 = vmatpush1.bf16.xpose.msra.mxu0 0
    %621 = vmatprep.subr.bf16.mxu0 0
    %622 = vmatpush1.bf16.xpose.msra.mxu0 0
    %623 = vmatprep.subr.bf16.mxu0 0
    %624 = vmatpush1.bf16.xpose.msra.mxu0 0
    %625 = vmatprep.subr.bf16.mxu0 0
    %626 = vmatpush1.bf16.xpose.msra.mxu0 0
    %627 = vmatprep.mubr.bf16.mxu0 0
    %628 = vmatmul.mubr.bf16.gmra.mrb[0].mxu0 %v590
    %v629 = vpop.f32.mrb[0].mxu0
    %v630 = vadd.f32 %v587, %v629
    %v631 = vpop.f32.mrb[0].mxu0
    %v632 = vpop.f32.mrb[0].mxu0
    %v633 = vpop.f32.mrb[0].mxu0
    %634 = vdwg.mxu0
    %vm635 = vcmask 122880
    %636 = vst.msk [vmem:[#allocation3] sm:$0x1] %vm635, %v630
    // Predicated region
    $region46: #{autogroup_forward_pallas.1} parent=1 // pred_check
      _
    $region47: #{autogroup_forward_pallas.1} parent=1 // pred_check_branch
      %638 = sbr.rel (0) target = $region49
    $region48: #{autogroup_forward_pallas.1} parent=1 // pred_region
      %s640 = ssub.s32 16, 16
      %641 = vsyncadd [#allocation4], %s640
      %s643 = sshll.u32 [#allocation3], 4
      %s644 = int_to_ptr.vmem [resolvable:$true] %s643
      %646 = dma.vmem_to_hbm [thread:$0]  %s644, 16, %s11, [#allocation4]
    $region49: #{autogroup_forward_pallas.1} parent=1 // pred_fallthru
      _
    // Predicated region
    $region50: #{autogroup_forward_pallas.1} parent=1 // pred_check
      _
    $region51: #{autogroup_forward_pallas.1} parent=1 // pred_check_branch
      %648 = sbr.rel (0) target = $region53
    $region52: #{autogroup_forward_pallas.1} parent=1 // pred_region
      %649 = dma.done [#allocation4], 16
    $region53: #{autogroup_forward_pallas.1} parent=1 // pred_fallthru
      _
    %650 = vsyncpa [#allocation4], 1

</llo_original>
